<compile_context>
chip_gen: v7x
topology: tpu7x:2x2x1
jax: 0.10.0
libtpu: 0.0.40
codegen_flags: <defaults>
</compile_context>

<pallas_src>
import numpy as np
import jax
import jax.numpy as jnp
from jax import lax
from jax.experimental import pallas as pl
from jax.experimental.pallas import tpu as pltpu


# ----------------------------------------------------------------------------
# Helpers
# ----------------------------------------------------------------------------
def _round_up(x, m):
    return ((x + m - 1) // m) * m


def _vmem_capacity_bytes():
    try:
        return int(pltpu.get_tpu_info().vmem_capacity_bytes)
    except Exception:
        # Conservative fallback: v7x per-TensorCore VMEM.
        return 64 * 1024 * 1024


def _pick_tile(dim, unit, pref_max):
    """Largest legal tile <= pref_max: a multiple of `unit`, or the full dim if dim < unit."""
    if dim <= unit:
        return dim
    return min(pref_max, (dim // unit) * unit)


def _auto_tiles(B, D, itemsize, capacity):
    tile_b = _pick_tile(B, 8, 512)
    tile_d = _pick_tile(D, 128, 1024)
    budget = int(0.45 * capacity)   # double-buffered working set target for the fuse pass

    def working_set(tb, td):
        # pass 2 dominates: 2x-buffered x1/x2/fused tiles + in-body f32 temporaries
        return tb * td * (6 * itemsize + 8)

    while working_set(tile_b, tile_d) > budget:
        if tile_b > 256:
            tile_b = max(8, ((tile_b // 2) // 8) * 8)
        elif tile_d > 512:
            tile_d = max(128, ((tile_d // 2) // 128) * 128)
        elif tile_b > 8:
            tile_b = max(8, ((tile_b // 2) // 8) * 8)
        elif tile_d > 128:
            tile_d = max(128, ((tile_d // 2) // 128) * 128)
        else:
            break
    return tile_b, tile_d


# ----------------------------------------------------------------------------
# Single-tile path: whole problem in one VMEM tile (softmax couples all rows).
# ----------------------------------------------------------------------------
def _fusion_single_tile_kernel(x1_ref, x2_ref, w_ref, fused_ref, a1_ref):
    x1 = x1_ref[...].astype(jnp.float32)            # (B, D)
    x2 = x2_ref[...].astype(jnp.float32)            # (B, D)
    w = w_ref[...]                                  # (1, D) f32, broadcasts over rows

    # Per-row matvec: VPU multiply + XLU lane reduce (keep off the MXU; 1-col result).
    tmp1 = jnp.sum(x1 * w, axis=-1, keepdims=True)  # (B, 1)

    # Softmax over the BATCH axis (dim=0 in the PyTorch module), max-subtracted, exact divide.
    m = jnp.max(tmp1, axis=0, keepdims=True)
    e = jnp.exp(tmp1 - m)
    denom = jnp.sum(e, axis=0, keepdims=True)
    alpha1 = e / denom                              # exact: only B divides, negligible cost

    # alpha1*x1 + (1-alpha1)*x2  ==  x2 + alpha1*(x1 - x2)
    fused_ref[...] = (x2 + alpha1 * (x1 - x2)).astype(fused_ref.dtype)
    a1_ref[...] = alpha1


def _single_tile_call(x1, x2, w2d, vmem_limit_bytes):
    B, D = x1.shape
    fused, a1 = pl.pallas_call(
        _fusion_single_tile_kernel,
        out_shape=(
            jax.ShapeDtypeStruct((B, D), x1.dtype),
            jax.ShapeDtypeStruct((B, 1), jnp.float32),
        ),
        in_specs=[
            pl.BlockSpec(memory_space=pltpu.MemorySpace.VMEM),
            pl.BlockSpec(memory_space=pltpu.MemorySpace.VMEM),
            pl.BlockSpec(memory_space=pltpu.MemorySpace.VMEM),
        ],
        out_specs=(
            pl.BlockSpec(memory_space=pltpu.MemorySpace.VMEM),
            pl.BlockSpec(memory_space=pltpu.MemorySpace.VMEM),
        ),
        compiler_params=pltpu.CompilerParams(vmem_limit_bytes=vmem_limit_bytes),
    )(x1, x2, w2d)
    return fused, a1


# ----------------------------------------------------------------------------
# Tiled two-pass path (large B*D):
#   pass 1: logits tmp1 = x1 @ w, grid (B tiles "parallel", D tiles "arbitrary"),
#           accumulating directly into the resident (tile_b, 1) output block;
#           the ragged last D tile is masked in-kernel.
#   wrapper: exact batch softmax on the tiny (B,) logits vector (XLA).
#   pass 2: fused = x2 + alpha1*(x1 - x2), fully parallel over both tile axes.
# ----------------------------------------------------------------------------
def _make_logits_kernel(D, tile_d):
    mask_needed = (D % tile_d) != 0

    def kernel(x1_ref, w_ref, logit_ref):
        j = pl.program_id(1)

        @pl.when(j == 0)
        def _():
            logit_ref[...] = jnp.zeros_like(logit_ref)

        x1 = x1_ref[...].astype(jnp.float32)        # (tile_b, tile_d)
        prod = x1 * w_ref[...]                      # (tile_b, tile_d)
        if mask_needed:
            col = j * tile_d + lax.broadcasted_iota(jnp.int32, (1, tile_d), 1)
            prod = jnp.where(col < D, prod, 0.0)    # mask ragged-edge garbage columns
        logit_ref[...] += jnp.sum(prod, axis=-1, keepdims=True)

    return kernel


def _fuse_tiled_kernel(a1_ref, x1_ref, x2_ref, fused_ref):
    x1 = x1_ref[...].astype(jnp.float32)
    x2 = x2_ref[...].astype(jnp.float32)
    fused_ref[...] = (x2 + a1_ref[...] * (x1 - x2)).astype(fused_ref.dtype)


def _tiled_call(x1, x2, w2d, tile_b, tile_d, vmem_limit_bytes):
    B, D = x1.shape
    n_bt = pl.cdiv(B, tile_b)
    n_dt = pl.cdiv(D, tile_d)

    # Pass 1: per-row logits (sequential reduction over D tiles, B tiles parallel).
    logits = pl.pallas_call(
        _make_logits_kernel(D, tile_d),
        out_shape=jax.ShapeDtypeStruct((B, 1), jnp.float32),
        grid_spec=pltpu.PrefetchScalarGridSpec(
            num_scalar_prefetch=0,
            grid=(n_bt, n_dt),
            in_specs=[
                pl.BlockSpec((tile_b, tile_d), lambda i, j: (i, j)),
                pl.BlockSpec((1, tile_d), lambda i, j: (0, j)),
            ],
            out_specs=pl.BlockSpec((tile_b, 1), lambda i, j: (i, 0)),
        ),
        compiler_params=pltpu.CompilerParams(
            dimension_semantics=("parallel", "arbitrary"),
            vmem_limit_bytes=vmem_limit_bytes),
    )(x1, w2d)

    # Batch softmax: tiny exact XLA op on a (B,) vector.
    alpha1 = jax.nn.softmax(logits[:, 0], axis=0)
    a1_2d = alpha1[:, None]

    # Pass 2: fused (independent per tile -> fully "parallel", megacore shardable).
    fused = pl.pallas_call(
        _fuse_tiled_kernel,
        out_shape=jax.ShapeDtypeStruct((B, D), x1.dtype),
        grid_spec=pltpu.PrefetchScalarGridSpec(
            num_scalar_prefetch=0,
            grid=(n_bt, n_dt),
            in_specs=[
                pl.BlockSpec((tile_b, 1), lambda i, j: (i, 0)),       # alpha1 tile
                pl.BlockSpec((tile_b, tile_d), lambda i, j: (i, j)),
                pl.BlockSpec((tile_b, tile_d), lambda i, j: (i, j)),
            ],
            out_specs=pl.BlockSpec((tile_b, tile_d), lambda i, j: (i, j)),
        ),
        compiler_params=pltpu.CompilerParams(
            dimension_semantics=("parallel", "parallel"),
            vmem_limit_bytes=vmem_limit_bytes),
    )(a1_2d, x1, x2)

    return fused, alpha1


# ----------------------------------------------------------------------------
# Wrapper
# ----------------------------------------------------------------------------
def attention_fusion(x1, x2, attention_weights, *,
                     tile_b=None, tile_d=None,
                     single_tile_vmem_budget=None,
                     as_numpy=False):
    """x1, x2: (B, D); attention_weights: (D,).

    Returns (fused, (alpha1, alpha2)). Alphas are JAX device arrays of shape (B,)
    by default; pass as_numpy=True to mirror PyTorch's .detach().cpu().numpy()
    (forces a host sync — keep it off the hot path).
    """
    B, D = x1.shape
    w2d = attention_weights.reshape(1, D).astype(jnp.float32)
    # NOTE: the PyTorch forward also computes tmp2 = x2 @ w but never uses it; omitted.

    itemsize = jnp.dtype(x1.dtype).itemsize
    capacity = _vmem_capacity_bytes()

    if single_tile_vmem_budget is None:
        # ~70% of VMEM (<=100 MiB): ~90-100 MiB on v5e/v6e, ~45 MiB on v7x.
        single_tile_vmem_budget = min(int(0.7 * capacity), 100 * 1024 * 1024)

    # refs (x1 + x2 + fused) + in-kernel f32 temporaries (upcasts, x1-x2, a1*(x1-x2))
    est_footprint = 3 * B * D * itemsize + 2 * B * D * 4

    if est_footprint <= single_tile_vmem_budget:
        fused, a1 = _single_tile_call(x1, x2, w2d, int(0.9 * capacity))
        alpha1 = a1[:, 0]
    else:
        tb, td = _auto_tiles(B, D, itemsize, capacity)
        if tile_b is not None:
            tb = tile_b
        if tile_d is not None:
            td = tile_d
        vmem_limit = min(int(0.9 * capacity), 64 * 1024 * 1024)
        fused, alpha1 = _tiled_call(x1, x2, w2d, tb, td, vmem_limit)

    alpha2 = 1.0 - alpha1
    if as_numpy:
        alpha1 = np.asarray(jax.device_get(alpha1))
        alpha2 = np.asarray(jax.device_get(alpha2))
    return fused, (alpha1, alpha2)


def _reference(x1, x2, w):
    # Elementwise multiply + reduce keeps the reference in exact f32; jnp.matmul's
    # default TPU precision (bf16 passes) would otherwise dominate the comparison error.
    tmp1 = jnp.sum(x1 * w[None, :], axis=-1)
    alpha1 = jax.nn.softmax(tmp1, axis=0)
    alpha2 = 1.0 - alpha1
    fused = alpha1[:, None] * x1 + alpha2[:, None] * x2
    return fused, alpha1, alpha2


if __name__ == "__main__":
    B, D = 8, 32  # output_dim = D

    key = jax.random.PRNGKey(0)
    k_w, k_x1, k_x2 = jax.random.split(key, 3)

    # nn.Parameter(torch.randn(output_dim)) analogue
    attention_weights = jax.random.normal(k_w, (D,), dtype=jnp.float32)
    x1 = jax.random.normal(k_x1, (B, D), dtype=jnp.float32)
    x2 = jax.random.normal(k_x2, (B, D), dtype=jnp.float32)

    # ---- small path: single VMEM tile ----
    fused, (alpha1, alpha2) = attention_fusion(x1, x2, attention_weights)
    jax.block_until_ready(fused)
    jax.block_until_ready(alpha1)

    ref_fused, ref_a1, ref_a2 = _reference(x1, x2, attention_weights)
    np.testing.assert_allclose(np.asarray(fused), np.asarray(ref_fused),
                               rtol=1e-4, atol=1e-4)
    np.testing.assert_allclose(np.asarray(alpha1), np.asarray(ref_a1),
                               rtol=2e-4, atol=1e-5)
    np.testing.assert_allclose(np.asarray(alpha2), np.asarray(ref_a2),
                               rtol=2e-4, atol=1e-5)

    # ---- tiled two-pass path (forced at small shapes so it is exercised here) ----
    # (Bt, Dt, tile_b, tile_d): multi-tile in B and D, ragged B edge, ragged D edge.
    cases = (
        (24, 384, 16, 128),     # ragged B (24 % 16), 3 D tiles
        (8, 200, 8, 128),       # ragged D (200 % 128) -> in-kernel column mask
        (16, 256, None, None),  # auto tile sizing
    )
    for (Bt, Dt, tb, td) in cases:
        kk_w, kk_1, kk_2 = jax.random.split(jax.random.PRNGKey(1), 3)
        wt = jax.random.normal(kk_w, (Dt,), dtype=jnp.float32)
        y1 = jax.random.normal(kk_1, (Bt, Dt), dtype=jnp.float32)
        y2 = jax.random.normal(kk_2, (Bt, Dt), dtype=jnp.float32)

        fused_t, (t1, t2) = attention_fusion(y1, y2, wt, tile_b=tb, tile_d=td,
                                             single_tile_vmem_budget=0)
        jax.block_until_ready(fused_t)

        rf, r1, r2 = _reference(y1, y2, wt)
        np.testing.assert_allclose(np.asarray(fused_t), np.asarray(rf),
                                   rtol=1e-4, atol=1e-4)
        np.testing.assert_allclose(np.asarray(t1), np.asarray(r1),
                                   rtol=2e-4, atol=1e-5)
        np.testing.assert_allclose(np.asarray(t2), np.asarray(r2),
                                   rtol=2e-4, atol=1e-5)

    # TODO(synk): the module's loss()/triple_loss() is a training-only host-side
    # triplet construction (Python loops + stack); not part of forward, so it is
    # not implemented as a kernel.

    print("KERNEL_OK")
</pallas_src>

<mosaic_0001>
module attributes {stable_mosaic.version = 11 : i64} {
  func.func @_fusion_single_tile_kernel(%arg0: memref<8x32xf32, #tpu.memory_space<vmem>>, %arg1: memref<8x32xf32, #tpu.memory_space<vmem>>, %arg2: memref<1x32xf32, #tpu.memory_space<vmem>>, %arg3: memref<8x32xf32, #tpu.memory_space<vmem>>, %arg4: memref<8x1xf32, #tpu.memory_space<vmem>>) attributes {dimension_semantics = [], scalar_prefetch = 0 : i64, scratch_operands = 0 : i64, tpu.core_type = #tpu.core_type<tc>} {
    %c0 = arith.constant 0 : index
    %c0_0 = arith.constant 0 : index
    %0 = vector.load %arg0[%c0, %c0_0] : memref<8x32xf32, #tpu.memory_space<vmem>>, vector<8x32xf32>
    %c0_1 = arith.constant 0 : index
    %c0_2 = arith.constant 0 : index
    %1 = vector.load %arg1[%c0_1, %c0_2] : memref<8x32xf32, #tpu.memory_space<vmem>>, vector<8x32xf32>
    %c0_3 = arith.constant 0 : index
    %c0_4 = arith.constant 0 : index
    %2 = vector.load %arg2[%c0_3, %c0_4] : memref<1x32xf32, #tpu.memory_space<vmem>>, vector<1x32xf32>
    %3 = vector.broadcast %2 : vector<1x32xf32> to vector<8x32xf32>
    %4 = arith.mulf %0, %3 : vector<8x32xf32>
    %cst = arith.constant dense<0.000000e+00> : vector<8xf32>
    %5 = vector.multi_reduction <add>, %4, %cst [1] : vector<8x32xf32> to vector<8xf32>
    %6 = vector.shape_cast %5 : vector<8xf32> to vector<8x1xf32>
    %cst_5 = arith.constant dense<0xFF800000> : vector<1xf32>
    %7 = vector.multi_reduction <maximumf>, %6, %cst_5 [0] : vector<8x1xf32> to vector<1xf32>
    %8 = vector.shape_cast %7 : vector<1xf32> to vector<1x1xf32>
    %9 = vector.broadcast %8 : vector<1x1xf32> to vector<8x1xf32>
    %10 = arith.subf %6, %9 : vector<8x1xf32>
    %11 = math.exp %10 : vector<8x1xf32>
    %cst_6 = arith.constant dense<0.000000e+00> : vector<1xf32>
    %12 = vector.multi_reduction <add>, %11, %cst_6 [0] : vector<8x1xf32> to vector<1xf32>
    %13 = vector.shape_cast %12 : vector<1xf32> to vector<1x1xf32>
    %14 = vector.broadcast %13 : vector<1x1xf32> to vector<8x1xf32>
    %15 = arith.divf %11, %14 : vector<8x1xf32>
    %16 = arith.subf %0, %1 : vector<8x32xf32>
    %17 = vector.broadcast %15 : vector<8x1xf32> to vector<8x32xf32>
    %18 = arith.mulf %17, %16 : vector<8x32xf32>
    %19 = arith.addf %1, %18 : vector<8x32xf32>
    %c0_7 = arith.constant 0 : index
    %c0_8 = arith.constant 0 : index
    %20 = vector.load %arg3[%c0_7, %c0_8] : memref<8x32xf32, #tpu.memory_space<vmem>>, vector<8x32xf32>
    tpu.vector_store %arg3[%c0_7, %c0_8], %19 {strides = array<i32>} : memref<8x32xf32, #tpu.memory_space<vmem>>, vector<8x32xf32>,
    %c0_9 = arith.constant 0 : index
    %c0_10 = arith.constant 0 : index
    %21 = vector.load %arg4[%c0_9, %c0_10] : memref<8x1xf32, #tpu.memory_space<vmem>>, vector<8x1xf32>
    tpu.vector_store %arg4[%c0_9, %c0_10], %15 {strides = array<i32>} : memref<8x1xf32, #tpu.memory_space<vmem>>, vector<8x1xf32>,
    return
  }
}

</mosaic_0001>

<llo_original>
// kernel: tpu_custom_call.1
$region0: #{tpu_custom_call.1}
  #allocation0 [shape = 'u32[]', space=smem, size = 0x4, offset = 0x4, fixed_abs, tag = 'smem constant byte address 0x4 - core index']
  #allocation1 [shape = 'u32[144,128]{1,0:T(1,128)}', space=vmem, size = 0x12000, scoped, tag = 'internal scratch']
  %s0 = inlined_call_operand.hbm [shape: f32[8,32], index: 0, kind: input, shape index: {}]
  %s1 = inlined_call_operand.hbm [shape: f32[8,32], index: 1, kind: input, shape index: {}]
  %s2 = inlined_call_operand.vmem [shape: f32[1,32], index: 2, kind: input, shape index: {}]
  %s3 = inlined_call_operand.hbm [shape: f32[8,32], index: 3, kind: output, shape index: {0}]
  %s4 = inlined_call_operand.vmem [shape: f32[8,1], index: 4, kind: output, shape index: {1}]
  %5 = xla_tuple %s3, %s4
  %s6 = sld [smem:[#allocation0]]
  $region38: #{tpu_custom_call.1} parent=0
    _
  %s8 = ssub.s32 1, %s6
  %s9 = scalar_select 0, %s8, %s6
  $region1: #{tpu_custom_call.1} parent=0
    #allocation2 [shape = 'u8[4096]{0}', space=vmem, size = 0x1000, scoped, tag = 'input window, operand 0, single buffered']
    #allocation3 [shape = 's32[1]{0}', space=sflag, size = 0x4, scoped, tag = 'scoped memory for tpu_custom_call.1']
    #allocation4 [shape = 's32[1]{0}', space=sflag, size = 0x4, scoped, tag = 'scoped memory for tpu_custom_call.1']
    #allocation5 [shape = 'u8[4096]{0}', space=vmem, size = 0x1000, scoped, tag = 'input window, operand 1, single buffered']
    #allocation6 [shape = 's32[1]{0}', space=sflag, size = 0x4, scoped, tag = 'scoped memory for tpu_custom_call.1']
    #allocation7 [shape = 'u8[4096]{0}', space=vmem, size = 0x1000, scoped, tag = 'output window, operand 0, single buffered']
    %10 = vsyncpa [#allocation3], 0
    %11 = vsyncpa [#allocation6], 0
    %12 = vsyncpa [#allocation4], 0
    // Predicated region
    $region2: #{tpu_custom_call.1} parent=1 // pred_check
      _
    $region3: #{tpu_custom_call.1} parent=1 // pred_check_branch
      %14 = sbr.rel (0) target = $region5
    $region4: #{tpu_custom_call.1} parent=1 // pred_region
      %s16 = ssub.s32 128, 128
      %17 = vsyncadd [#allocation3], %s16
      %s19 = sshll.u32 [#allocation2], 4
      %s20 = int_to_ptr.vmem [resolvable:$true] %s19
      %22 = dma.hbm_to_vmem [thread:$0]  %s0, 128, %s20, [#allocation3]
    $region5: #{tpu_custom_call.1} parent=1 // pred_fallthru
      _
    // Predicated region
    $region6: #{tpu_custom_call.1} parent=1 // pred_check
      _
    $region7: #{tpu_custom_call.1} parent=1 // pred_check_branch
      %24 = sbr.rel (0) target = $region9
    $region8: #{tpu_custom_call.1} parent=1 // pred_region
      %s26 = ssub.s32 128, 128
      %27 = vsyncadd [#allocation6], %s26
      %s29 = sshll.u32 [#allocation5], 4
      %s30 = int_to_ptr.vmem [resolvable:$true] %s29
      %32 = dma.hbm_to_vmem [thread:$0]  %s1, 128, %s30, [#allocation6]
    $region9: #{tpu_custom_call.1} parent=1 // pred_fallthru
      _
    // Predicated region
    $region10: #{tpu_custom_call.1} parent=1 // pred_check
      _
    $region11: #{tpu_custom_call.1} parent=1 // pred_check_branch
      %34 = sbr.rel (0) target = $region13
    $region12: #{tpu_custom_call.1} parent=1 // pred_region
      _
    $region13: #{tpu_custom_call.1} parent=1 // pred_fallthru
      _
    // Predicated region
    $region14: #{tpu_custom_call.1} parent=1 // pred_check
      _
    $region15: #{tpu_custom_call.1} parent=1 // pred_check_branch
      %36 = sbr.rel (0) target = $region17
    $region16: #{tpu_custom_call.1} parent=1 // pred_region
      %37 = dma.done [#allocation3], 128
    $region17: #{tpu_custom_call.1} parent=1 // pred_fallthru
      _
    // Predicated region
    $region18: #{tpu_custom_call.1} parent=1 // pred_check
      _
    $region19: #{tpu_custom_call.1} parent=1 // pred_check_branch
      %39 = sbr.rel (0) target = $region21
    $region20: #{tpu_custom_call.1} parent=1 // pred_region
      %40 = dma.done [#allocation6], 128
    $region21: #{tpu_custom_call.1} parent=1 // pred_fallthru
      _
    %v41 = vld [vmem:[#allocation2] sm:$0xff]
    %v42 = vld [vmem:[#allocation5] sm:$0xff]
    %v43 = vld [vmem:[%s2] sm:$0x1]
    %v45 = vlaneseq
    %v46 = vshrl.u32 %v45, 7
    %v47 = vsub.s32 0, %v46
    %v48 = vrot.slane %v43, %v47
    %v50 = vmul.f32 %v41, %v48
    %vm51 = vcmask 261120
    %v52 = vsel %vm51, %v50, 0.0
    %53 = vadd.xlane.f32.xlu0 %v52
    %v54 = vpop.xlane.xlu0 %53
    %v55 = vrot.slane %v54, 4
    %v56 = vmax.f32 %v54, %v55
    %v57 = vrot.slane %v56, 2
    %v58 = vmax.f32 %v56, %v57
    %v59 = vrot.slane %v58, 1
    %v60 = vmax.f32 %v58, %v59
    %v61 = vsub.f32 %v54, %v60
    %v62 = vmul.f32 %v61, 1.442695
    %v63 = vpow.pop %v62
    %v64 = vrot.slane %v63, 4
    %v65 = vadd.f32 %v63, %v64
    %v66 = vrot.slane %v65, 2
    %v67 = vadd.f32 %v65, %v66
    %v68 = vrot.slane %v67, 1
    %v69 = vadd.f32 %v67, %v68
    %v70 = vrcp.pop %v69
    %v71 = vmul.f32 %v63, %v70
    %v72 = vsub.f32 %v41, %v42
    %v73 = vmul.f32 %v71, %v72
    %v74 = vadd.f32 %v42, %v73
    %75 = vst.msk [vmem:[#allocation7] sm:$0xff] %vm51, %v74
    %vm76 = vcmask 7168
    %77 = vst.msk [vmem:[%s4] sm:$0xff] %vm76, %v71
    // Predicated region
    $region22: #{tpu_custom_call.1} parent=1 // pred_check
      _
    $region23: #{tpu_custom_call.1} parent=1 // pred_check_branch
      %79 = sbr.rel (0) target = $region25
    $region24: #{tpu_custom_call.1} parent=1 // pred_region
      %s81 = ssub.s32 128, 128
      %82 = vsyncadd [#allocation4], %s81
      %s84 = sshll.u32 [#allocation7], 4
      %s85 = int_to_ptr.vmem [resolvable:$true] %s84
      %87 = dma.vmem_to_hbm [thread:$0]  %s85, 128, %s3, [#allocation4]
    $region25: #{tpu_custom_call.1} parent=1 // pred_fallthru
      _
    // Predicated region
    $region26: #{tpu_custom_call.1} parent=1 // pred_check
      _
    $region27: #{tpu_custom_call.1} parent=1 // pred_check_branch
      %89 = sbr.rel (0) target = $region29
    $region28: #{tpu_custom_call.1} parent=1 // pred_region
      _
    $region29: #{tpu_custom_call.1} parent=1 // pred_fallthru
      _
    // Predicated region
    $region30: #{tpu_custom_call.1} parent=1 // pred_check
      _
    $region31: #{tpu_custom_call.1} parent=1 // pred_check_branch
      %91 = sbr.rel (0) target = $region33
    $region32: #{tpu_custom_call.1} parent=1 // pred_region
      %92 = dma.done [#allocation4], 128
    $region33: #{tpu_custom_call.1} parent=1 // pred_fallthru
      _
    // Predicated region
    $region34: #{tpu_custom_call.1} parent=1 // pred_check
      _
    $region35: #{tpu_custom_call.1} parent=1 // pred_check_branch
      %94 = sbr.rel (0) target = $region37
    $region36: #{tpu_custom_call.1} parent=1 // pred_region
      _
    $region37: #{tpu_custom_call.1} parent=1 // pred_fallthru
      _
    %95 = vsyncpa [#allocation3], 1
    %96 = vsyncpa [#allocation6], 1
    %97 = vsyncpa [#allocation4], 1

</llo_original>
